<compile_context>
chip_gen: v5e
topology: v5e:2x2
jax: 0.10.0
libtpu: 0.0.40
codegen_flags: <defaults>
</compile_context>

<pallas_src>
import jax
import jax.numpy as jnp
from jax.experimental import pallas as pl
from jax.experimental.pallas import tpu as pltpu


def _round_up(v, m):
    return (v + m - 1) // m * m


# -----------------------------------------------------------------------------
# Fused Mlp kernel: out = (gelu(x @ W1 + b1)) @ W2 + b2
# -----------------------------------------------------------------------------
def _mlp_kernel(x_ref, w1_ref, b1_ref, w2_ref, b2_ref, o_ref):
    # fc1 on the MXU: bf16 x bf16 -> f32 accumulate
    h = jnp.dot(x_ref[...], w1_ref[...], preferred_element_type=jnp.float32)
    h = h + b1_ref[...]                                    # (tm, Hp) + (1, Hp)

    # GELU (tanh approximation; tanh runs on the EUP slot).
    c = 0.7978845608028654  # sqrt(2/pi)
    h = 0.5 * h * (1.0 + jnp.tanh(c * (h + 0.044715 * h * h * h)))

    # Dropout(p=0.0) is the identity.

    # fc2 on the MXU (hidden activation cast to bf16, f32 accumulate).
    o = jnp.dot(h.astype(jnp.bfloat16), w2_ref[...],
                preferred_element_type=jnp.float32)
    o = o + b2_ref[...]
    o_ref[...] = o.astype(o_ref.dtype)


# -----------------------------------------------------------------------------
# Parameter init (matches torch.nn.Linear default init), padded once.
# -----------------------------------------------------------------------------
def init_mlp_params(key, in_features, hidden_features=None, out_features=None):
    out_features = out_features or in_features
    hidden_features = hidden_features or in_features
    k1, k2, k3, k4 = jax.random.split(key, 4)

    lim1 = 1.0 / jnp.sqrt(float(in_features))
    lim2 = 1.0 / jnp.sqrt(float(hidden_features))
    w1 = jax.random.uniform(k1, (in_features, hidden_features), jnp.float32, -lim1, lim1)
    b1 = jax.random.uniform(k2, (hidden_features,), jnp.float32, -lim1, lim1)
    w2 = jax.random.uniform(k3, (hidden_features, out_features), jnp.float32, -lim2, lim2)
    b2 = jax.random.uniform(k4, (out_features,), jnp.float32, -lim2, lim2)

    # Pre-pad to lane-dense panels and pre-cast matmul operands to bf16 ONCE.
    Kp = _round_up(in_features, 128)
    Hp = _round_up(hidden_features, 128)
    Np = _round_up(out_features, 128)
    w1_p = jnp.zeros((Kp, Hp), jnp.bfloat16).at[:in_features, :hidden_features].set(
        w1.astype(jnp.bfloat16))
    w2_p = jnp.zeros((Hp, Np), jnp.bfloat16).at[:hidden_features, :out_features].set(
        w2.astype(jnp.bfloat16))
    b1_p = jnp.zeros((1, Hp), jnp.float32).at[:, :hidden_features].set(b1)
    b2_p = jnp.zeros((1, Np), jnp.float32).at[:, :out_features].set(b2)

    return {
        # raw f32 (for reference checks)
        "w1": w1, "b1": b1, "w2": w2, "b2": b2,
        # pre-padded / pre-cast kernel operands
        "w1_p": w1_p, "b1_p": b1_p, "w2_p": w2_p, "b2_p": b2_p,
        # static dims (plain Python ints)
        "dims": (in_features, hidden_features, out_features),
        "padded_dims": (Kp, Hp, Np),
    }


# -----------------------------------------------------------------------------
# Forward wrapper
# -----------------------------------------------------------------------------
def mlp_forward(params, x, *, tm=512):
    """x: (..., in_features) -> (..., out_features)."""
    in_f, _, out_f = params["dims"]
    Kp, Hp, Np = params["padded_dims"]

    lead = x.shape[:-1]
    M = 1
    for d in lead:
        M *= d

    # Tile the token dim; one big tile if everything fits (per-step overhead
    # dominates at small M, so make tiles as large as possible).
    tm_eff = min(tm, _round_up(M, 16))          # 16-row multiple for bf16 sublanes
    Mp = _round_up(M, tm_eff)

    x2 = x.reshape(M, in_f).astype(jnp.bfloat16)
    x_p = jnp.zeros((Mp, Kp), jnp.bfloat16).at[:M, :in_f].set(x2)

    out = pl.pallas_call(
        _mlp_kernel,
        out_shape=jax.ShapeDtypeStruct((Mp, Np), jnp.float32),
        grid_spec=pltpu.PrefetchScalarGridSpec(
            num_scalar_prefetch=0,
            grid=(Mp // tm_eff,),
            in_specs=[
                pl.BlockSpec((tm_eff, Kp), lambda i: (i, 0)),   # x tile
                pl.BlockSpec((Kp, Hp), lambda i: (0, 0)),       # W1 (resident)
                pl.BlockSpec((1, Hp), lambda i: (0, 0)),        # b1
                pl.BlockSpec((Hp, Np), lambda i: (0, 0)),       # W2 (resident)
                pl.BlockSpec((1, Np), lambda i: (0, 0)),        # b2
            ],
            out_specs=pl.BlockSpec((tm_eff, Np), lambda i: (i, 0)),
        ),
        compiler_params=pltpu.CompilerParams(
            dimension_semantics=("parallel",),
        ),
    )(x_p, params["w1_p"], params["b1_p"], params["w2_p"], params["b2_p"])

    y = out[:M, :out_f].astype(x.dtype)
    return y.reshape(*lead, out_f)


# -----------------------------------------------------------------------------
# Pure-JAX reference (f32) for a tolerance sanity check.
# -----------------------------------------------------------------------------
def _mlp_ref(params, x):
    h = x @ params["w1"] + params["b1"]
    c = 0.7978845608028654
    h = 0.5 * h * (1.0 + jnp.tanh(c * (h + 0.044715 * h * h * h)))
    return h @ params["w2"] + params["b2"]


# -----------------------------------------------------------------------------
if __name__ == "__main__":
    key = jax.random.PRNGKey(0)
    k_param, k_x = jax.random.split(key)

    batch, seq = 2, 8
    in_features, hidden_features, out_features = 32, 128, 32

    params = init_mlp_params(k_param, in_features, hidden_features, out_features)
    x = jax.random.normal(k_x, (batch, seq, in_features), jnp.float32)

    y = mlp_forward(params, x)
    jax.block_until_ready(y)

    # structural + numerical sanity checks (loose tolerance: bf16 MXU inputs)
    assert y.shape == (batch, seq, out_features)
    assert bool(jnp.all(jnp.isfinite(y)))
    y_ref = _mlp_ref(params, x)
    assert float(jnp.max(jnp.abs(y - y_ref))) < 5e-2, "mismatch vs f32 reference"

    print("KERNEL_OK")
</pallas_src>

<mosaic_0001>
module attributes {stable_mosaic.version = 11 : i64} {
  func.func @_mlp_kernel(%arg0: i32, %arg1: memref<16x128xbf16, #tpu.memory_space<vmem>>, %arg2: memref<128x128xbf16, #tpu.memory_space<vmem>>, %arg3: memref<1x128xf32, #tpu.memory_space<vmem>>, %arg4: memref<128x128xbf16, #tpu.memory_space<vmem>>, %arg5: memref<1x128xf32, #tpu.memory_space<vmem>>, %arg6: memref<16x128xf32, #tpu.memory_space<vmem>>) attributes {dimension_semantics = [#tpu.dimension_semantics<parallel>], iteration_bounds = array<i64: 1>, scalar_prefetch = 0 : i64, scratch_operands = 0 : i64, tpu.core_type = #tpu.core_type<tc>, window_params = [{transform_indices = @transform_0, window_bounds = array<i64: 16, 128>}, {pipeline_mode = #tpu.pipeline_mode<synchronous>, transform_indices = @transform_1, window_bounds = array<i64: 128, 128>}, {pipeline_mode = #tpu.pipeline_mode<synchronous>, transform_indices = @transform_2, window_bounds = array<i64: 1, 128>}, {pipeline_mode = #tpu.pipeline_mode<synchronous>, transform_indices = @transform_3, window_bounds = array<i64: 128, 128>}, {pipeline_mode = #tpu.pipeline_mode<synchronous>, transform_indices = @transform_4, window_bounds = array<i64: 1, 128>}, {transform_indices = @transform_5, window_bounds = array<i64: 16, 128>}]} {
    %c0 = arith.constant 0 : index
    %c0_0 = arith.constant 0 : index
    %0 = vector.load %arg1[%c0, %c0_0] : memref<16x128xbf16, #tpu.memory_space<vmem>>, vector<16x128xbf16>
    %c0_1 = arith.constant 0 : index
    %c0_2 = arith.constant 0 : index
    %1 = vector.load %arg2[%c0_1, %c0_2] : memref<128x128xbf16, #tpu.memory_space<vmem>>, vector<128x128xbf16>
    %cst = arith.constant dense<0.000000e+00> : vector<16x128xf32>
    %2 = tpu.matmul %0, %1, %cst {dimension_numbers = #tpu.dot_dimension_numbers<[1], [0], [0], [1], [0, 0, 1, 1], [], []>} : vector<16x128xbf16>, vector<128x128xbf16>, vector<16x128xf32> -> vector<16x128xf32>
    %c0_3 = arith.constant 0 : index
    %c0_4 = arith.constant 0 : index
    %3 = vector.load %arg3[%c0_3, %c0_4] : memref<1x128xf32, #tpu.memory_space<vmem>>, vector<1x128xf32>
    %4 = vector.broadcast %3 : vector<1x128xf32> to vector<16x128xf32>
    %5 = arith.addf %2, %4 : vector<16x128xf32>
    %cst_5 = arith.constant 5.000000e-01 : f32
    %6 = vector.broadcast %cst_5 : f32 to vector<16x128xf32>
    %7 = arith.mulf %6, %5 : vector<16x128xf32>
    %cst_6 = arith.constant 4.471500e-02 : f32
    %8 = vector.broadcast %cst_6 : f32 to vector<16x128xf32>
    %9 = arith.mulf %8, %5 : vector<16x128xf32>
    %10 = arith.mulf %9, %5 : vector<16x128xf32>
    %11 = arith.mulf %10, %5 : vector<16x128xf32>
    %12 = arith.addf %5, %11 : vector<16x128xf32>
    %cst_7 = arith.constant 0.797884583 : f32
    %13 = vector.broadcast %cst_7 : f32 to vector<16x128xf32>
    %14 = arith.mulf %13, %12 : vector<16x128xf32>
    %15 = math.tanh %14 : vector<16x128xf32>
    %cst_8 = arith.constant 1.000000e+00 : f32
    %16 = vector.broadcast %cst_8 : f32 to vector<16x128xf32>
    %17 = arith.addf %16, %15 : vector<16x128xf32>
    %18 = arith.mulf %7, %17 : vector<16x128xf32>
    %19 = arith.truncf %18 : vector<16x128xf32> to vector<16x128xbf16>
    %c0_9 = arith.constant 0 : index
    %c0_10 = arith.constant 0 : index
    %20 = vector.load %arg4[%c0_9, %c0_10] : memref<128x128xbf16, #tpu.memory_space<vmem>>, vector<128x128xbf16>
    %cst_11 = arith.constant dense<0.000000e+00> : vector<16x128xf32>
    %21 = tpu.matmul %19, %20, %cst_11 {dimension_numbers = #tpu.dot_dimension_numbers<[1], [0], [0], [1], [0, 0, 1, 1], [], []>} : vector<16x128xbf16>, vector<128x128xbf16>, vector<16x128xf32> -> vector<16x128xf32>
    %c0_12 = arith.constant 0 : index
    %c0_13 = arith.constant 0 : index
    %22 = vector.load %arg5[%c0_12, %c0_13] : memref<1x128xf32, #tpu.memory_space<vmem>>, vector<1x128xf32>
    %23 = vector.broadcast %22 : vector<1x128xf32> to vector<16x128xf32>
    %24 = arith.addf %21, %23 : vector<16x128xf32>
    %c0_14 = arith.constant 0 : index
    %c0_15 = arith.constant 0 : index
    %25 = vector.load %arg6[%c0_14, %c0_15] : memref<16x128xf32, #tpu.memory_space<vmem>>, vector<16x128xf32>
    tpu.vector_store %arg6[%c0_14, %c0_15], %24 {strides = array<i32>} : memref<16x128xf32, #tpu.memory_space<vmem>>, vector<16x128xf32>,
    return
  }
  func.func @transform_0(%arg0: i32) -> (i32, i32) {
    %c0_i32 = arith.constant 0 : i32
    %c0_i32_0 = arith.constant 0 : i32
    return %arg0, %c0_i32 : i32, i32
  }
  func.func @transform_1(%arg0: i32) -> (i32, i32) {
    %c0_i32 = arith.constant 0 : i32
    %c0_i32_0 = arith.constant 0 : i32
    %c0_i32_1 = arith.constant 0 : i32
    return %c0_i32, %c0_i32_0 : i32, i32
  }
  func.func @transform_2(%arg0: i32) -> (i32, i32) {
    %c0_i32 = arith.constant 0 : i32
    %c0_i32_0 = arith.constant 0 : i32
    %c0_i32_1 = arith.constant 0 : i32
    return %c0_i32, %c0_i32_0 : i32, i32
  }
  func.func @transform_3(%arg0: i32) -> (i32, i32) {
    %c0_i32 = arith.constant 0 : i32
    %c0_i32_0 = arith.constant 0 : i32
    %c0_i32_1 = arith.constant 0 : i32
    return %c0_i32, %c0_i32_0 : i32, i32
  }
  func.func @transform_4(%arg0: i32) -> (i32, i32) {
    %c0_i32 = arith.constant 0 : i32
    %c0_i32_0 = arith.constant 0 : i32
    %c0_i32_1 = arith.constant 0 : i32
    return %c0_i32, %c0_i32_0 : i32, i32
  }
  func.func @transform_5(%arg0: i32) -> (i32, i32) {
    %c0_i32 = arith.constant 0 : i32
    %c0_i32_0 = arith.constant 0 : i32
    return %arg0, %c0_i32 : i32, i32
  }
}

</mosaic_0001>

<llo_original>
// kernel: tpu_custom_call.1
$region0: #{tpu_custom_call.1}
  #allocation0 [shape = 'u32[]', space=smem, size = 0x4, offset = 0x4, fixed_abs, tag = 'smem constant byte address 0x4 - core index']
  #allocation1 [shape = 'u32[72,128]{1,0:T(1,128)}', space=vmem, size = 0x9000, scoped, tag = 'internal scratch']
  %s0 = inlined_call_operand.hbm [shape: bf16[16,128], index: 0, kind: input, shape index: {}]
  %s1 = inlined_call_operand.hbm [shape: bf16[128,128], index: 1, kind: input, shape index: {}]
  %s2 = inlined_call_operand.vmem [shape: f32[1,128], index: 2, kind: input, shape index: {}]
  %s3 = inlined_call_operand.hbm [shape: bf16[128,128], index: 3, kind: input, shape index: {}]
  %s4 = inlined_call_operand.vmem [shape: f32[1,128], index: 4, kind: input, shape index: {}]
  %s5 = inlined_call_operand.hbm [shape: f32[16,128], index: 5, kind: output, shape index: {}]
  %s6 = sld [smem:[#allocation0]]
  $region42: #{tpu_custom_call.1} parent=0
    _
  %s8 = ssub.s32 1, %s6
  %s9 = scalar_select 0, %s8, %s6
  $region1: #{tpu_custom_call.1} parent=0
    #allocation2 [shape = 'u8[4096]{0}', space=vmem, size = 0x1000, scoped, tag = 'input window, operand 0, single buffered']
    #allocation3 [shape = 's32[1]{0}', space=sflag, size = 0x4, scoped, tag = 'scoped memory for tpu_custom_call.1']
    #allocation4 [shape = 's32[1]{0}', space=sflag, size = 0x4, scoped, tag = 'scoped memory for tpu_custom_call.1']
    #allocation5 [shape = 'u8[32768]{0}', space=vmem, size = 0x8000, scoped, tag = 'input window, operand 1, single buffered']
    #allocation6 [shape = 's32[1]{0}', space=sflag, size = 0x4, scoped, tag = 'scoped memory for tpu_custom_call.1']
    #allocation7 [shape = 'u8[32768]{0}', space=vmem, size = 0x8000, scoped, tag = 'input window, operand 3, single buffered']
    #allocation8 [shape = 'u8[8192]{0}', space=vmem, size = 0x2000, scoped, tag = 'output window, operand 0, single buffered']
    %10 = vsyncpa [#allocation3], 0
    %11 = vsyncpa [#allocation6], 0
    %12 = vsyncpa [#allocation4], 0
    // Predicated region
    $region2: #{tpu_custom_call.1} parent=1 // pred_check
      _
    $region3: #{tpu_custom_call.1} parent=1 // pred_check_branch
      %14 = sbr.rel (0) target = $region5
    $region4: #{tpu_custom_call.1} parent=1 // pred_region
      %16 = vsyncadd [#allocation3], 0
      %s17 = sshll.u32 %s0, 4
      %s18 = int_to_ptr.hbm [resolvable:$true] %s17
      %s19 = sshll.u32 [#allocation2], 4
      %s20 = int_to_ptr.vmem [resolvable:$true] %s19
      %25 = dma.hbm_to_vmem [thread:$0]  %s18, 128, %s20, [#allocation3], 64, 64, 4
    $region5: #{tpu_custom_call.1} parent=1 // pred_fallthru
      _
    // Predicated region
    $region6: #{tpu_custom_call.1} parent=1 // pred_check
      _
    $region7: #{tpu_custom_call.1} parent=1 // pred_check_branch
      %27 = sbr.rel (0) target = $region9
    $region8: #{tpu_custom_call.1} parent=1 // pred_region
      %29 = vsyncadd [#allocation6], 0
      %s30 = sshll.u32 %s1, 4
      %s31 = int_to_ptr.hbm [resolvable:$true] %s30
      %s32 = sshll.u32 [#allocation5], 4
      %s33 = int_to_ptr.vmem [resolvable:$true] %s32
      %38 = dma.hbm_to_vmem [thread:$0]  %s31, 1024, %s33, [#allocation6], 64, 64, 4
    $region9: #{tpu_custom_call.1} parent=1 // pred_fallthru
      _
    // Predicated region
    $region10: #{tpu_custom_call.1} parent=1 // pred_check
      _
    $region11: #{tpu_custom_call.1} parent=1 // pred_check_branch
      %40 = sbr.rel (0) target = $region13
    $region12: #{tpu_custom_call.1} parent=1 // pred_region
      _
    $region13: #{tpu_custom_call.1} parent=1 // pred_fallthru
      _
    // Predicated region
    $region14: #{tpu_custom_call.1} parent=1 // pred_check
      _
    $region15: #{tpu_custom_call.1} parent=1 // pred_check_branch
      %42 = sbr.rel (0) target = $region17
    $region16: #{tpu_custom_call.1} parent=1 // pred_region
      %44 = vsyncadd [#allocation6], 0
      %s45 = sshll.u32 %s3, 4
      %s46 = int_to_ptr.hbm [resolvable:$true] %s45
      %s47 = sshll.u32 [#allocation7], 4
      %s48 = int_to_ptr.vmem [resolvable:$true] %s47
      %53 = dma.hbm_to_vmem [thread:$0]  %s46, 1024, %s48, [#allocation6], 64, 64, 4
    $region17: #{tpu_custom_call.1} parent=1 // pred_fallthru
      _
    // Predicated region
    $region18: #{tpu_custom_call.1} parent=1 // pred_check
      _
    $region19: #{tpu_custom_call.1} parent=1 // pred_check_branch
      %55 = sbr.rel (0) target = $region21
    $region20: #{tpu_custom_call.1} parent=1 // pred_region
      _
    $region21: #{tpu_custom_call.1} parent=1 // pred_fallthru
      _
    // Predicated region
    $region22: #{tpu_custom_call.1} parent=1 // pred_check
      _
    $region23: #{tpu_custom_call.1} parent=1 // pred_check_branch
      %57 = sbr.rel (0) target = $region25
    $region24: #{tpu_custom_call.1} parent=1 // pred_region
      %59 = dma.done [#allocation3], 128
    $region25: #{tpu_custom_call.1} parent=1 // pred_fallthru
      _
    // Predicated region
    $region26: #{tpu_custom_call.1} parent=1 // pred_check
      _
    $region27: #{tpu_custom_call.1} parent=1 // pred_check_branch
      %61 = sbr.rel (0) target = $region29
    $region28: #{tpu_custom_call.1} parent=1 // pred_region
      %63 = dma.done [#allocation6], 1024
    $region29: #{tpu_custom_call.1} parent=1 // pred_fallthru
      _
    // Predicated region
    $region30: #{tpu_custom_call.1} parent=1 // pred_check
      _
    $region31: #{tpu_custom_call.1} parent=1 // pred_check_branch
      %65 = sbr.rel (0) target = $region33
    $region32: #{tpu_custom_call.1} parent=1 // pred_region
      %67 = dma.done [#allocation6], 1024
    $region33: #{tpu_custom_call.1} parent=1 // pred_fallthru
      _
    %v68 = vld [vmem:[#allocation2] sm:$0xf]
    %v69 = vld [vmem:[#allocation2 + $0x4] sm:$0xf]
    %v70 = vld [vmem:[#allocation5] sm:$0xf]
    %v71 = vld [vmem:[#allocation5 + $0x4] sm:$0xf]
    %v72 = vld [vmem:[#allocation5 + $0x8] sm:$0xf]
    %v73 = vld [vmem:[#allocation5 + $0xc] sm:$0xf]
    %v74 = vld [vmem:[#allocation5 + $0x10] sm:$0xf]
    %v75 = vld [vmem:[#allocation5 + $0x14] sm:$0xf]
    %v76 = vld [vmem:[#allocation5 + $0x18] sm:$0xf]
    %v77 = vld [vmem:[#allocation5 + $0x1c] sm:$0xf]
    %v78 = vld [vmem:[#allocation5 + $0x20] sm:$0xf]
    %v79 = vld [vmem:[#allocation5 + $0x24] sm:$0xf]
    %v80 = vld [vmem:[#allocation5 + $0x28] sm:$0xf]
    %v81 = vld [vmem:[#allocation5 + $0x2c] sm:$0xf]
    %v82 = vld [vmem:[#allocation5 + $0x30] sm:$0xf]
    %v83 = vld [vmem:[#allocation5 + $0x34] sm:$0xf]
    %v84 = vld [vmem:[#allocation5 + $0x38] sm:$0xf]
    %v85 = vld [vmem:[#allocation5 + $0x3c] sm:$0xf]
    %v86 = vld [vmem:[%s2] sm:$0x1]
    %v88 = vperm.slane %v86, 0
    %v92 = vunpack.c.l.b16 %v68
    %v93 = vunpack.c.l.b16 %v69
    %v94 = vpack.c.b16 %v93, %v92
    %v112 = vunpack.c.l.b16 %v70
    %v113 = vunpack.c.l.b16 %v71
    %v114 = vunpack.c.l.b16 %v72
    %v115 = vunpack.c.l.b16 %v73
    %v116 = vunpack.c.l.b16 %v74
    %v117 = vunpack.c.l.b16 %v75
    %v118 = vunpack.c.l.b16 %v76
    %v119 = vunpack.c.l.b16 %v77
    %v120 = vunpack.c.l.b16 %v78
    %v121 = vunpack.c.l.b16 %v79
    %v122 = vunpack.c.l.b16 %v80
    %v123 = vunpack.c.l.b16 %v81
    %v124 = vunpack.c.l.b16 %v82
    %v125 = vunpack.c.l.b16 %v83
    %v126 = vunpack.c.l.b16 %v84
    %v127 = vunpack.c.l.b16 %v85
    %v128 = vpack.c.b16 %v113, %v112
    %v129 = vpack.c.b16 %v115, %v114
    %v130 = vpack.c.b16 %v117, %v116
    %v131 = vpack.c.b16 %v119, %v118
    %v132 = vpack.c.b16 %v121, %v120
    %v133 = vpack.c.b16 %v123, %v122
    %v134 = vpack.c.b16 %v125, %v124
    %v135 = vpack.c.b16 %v127, %v126
    %144 = vmatpush.bf16.msra.mxu0 %v135
    %145 = vmatpush.bf16.msra.mxu0 %v134
    %146 = vmatpush.bf16.msra.mxu0 %v133
    %147 = vmatpush.bf16.msra.mxu0 %v132
    %148 = vmatpush.bf16.msra.mxu0 %v131
    %149 = vmatpush.bf16.msra.mxu0 %v130
    %150 = vmatpush.bf16.msra.mxu0 %v129
    %151 = vmatpush.bf16.msra.mxu0 %v128
    %152 = vmatmul.bf16.gmra.mxu0 %v94
    %v153 = vpop.f32.mrf.mxu0
    %v154 = vadd.f32 %v88, %v153
    %v155 = vpop.f32.mrf.mxu0
    %v156 = vadd.f32 %v88, %v155
    %157 = vdwg.mxu0
    %v158 = vmul.f32 %v154, 0.5
    %v159 = vmul.f32 %v156, 0.5
    %v160 = vmul.f32 %v154, 0.044715
    %v161 = vmul.f32 %v156, 0.044715
    %v162 = vmul.f32 %v160, %v154
    %v163 = vmul.f32 %v161, %v156
    %v164 = vmul.f32 %v162, %v154
    %v165 = vmul.f32 %v163, %v156
    %v166 = vadd.f32 %v154, %v164
    %v167 = vadd.f32 %v156, %v165
    %v168 = vmul.f32 %v166, 0.7978846
    %v169 = vmul.f32 %v167, 0.7978846
    %v170 = vtanh.pop %v168
    %v171 = vtanh.pop %v169
    %v172 = vadd.f32 %v170, 1.0
    %v173 = vadd.f32 %v171, 1.0
    %v174 = vmul.f32 %v158, %v172
    %v175 = vmul.f32 %v159, %v173
    %v176 = vpack.c.bf16 %v175, %v174
    %v177 = vld [vmem:[#allocation7] sm:$0xf]
    %v178 = vld [vmem:[#allocation7 + $0x4] sm:$0xf]
    %v179 = vld [vmem:[#allocation7 + $0x8] sm:$0xf]
    %v180 = vld [vmem:[#allocation7 + $0xc] sm:$0xf]
    %v181 = vld [vmem:[#allocation7 + $0x10] sm:$0xf]
    %v182 = vld [vmem:[#allocation7 + $0x14] sm:$0xf]
    %v183 = vld [vmem:[#allocation7 + $0x18] sm:$0xf]
    %v184 = vld [vmem:[#allocation7 + $0x1c] sm:$0xf]
    %v185 = vld [vmem:[#allocation7 + $0x20] sm:$0xf]
    %v186 = vld [vmem:[#allocation7 + $0x24] sm:$0xf]
    %v187 = vld [vmem:[#allocation7 + $0x28] sm:$0xf]
    %v188 = vld [vmem:[#allocation7 + $0x2c] sm:$0xf]
    %v189 = vld [vmem:[#allocation7 + $0x30] sm:$0xf]
    %v190 = vld [vmem:[#allocation7 + $0x34] sm:$0xf]
    %v191 = vld [vmem:[#allocation7 + $0x38] sm:$0xf]
    %v192 = vld [vmem:[#allocation7 + $0x3c] sm:$0xf]
    %v193 = vld [vmem:[%s4] sm:$0x1]
    %v195 = vperm.slane %v193, 0
    %v213 = vunpack.c.l.b16 %v177
    %v214 = vunpack.c.l.b16 %v178
    %v215 = vunpack.c.l.b16 %v179
    %v216 = vunpack.c.l.b16 %v180
    %v217 = vunpack.c.l.b16 %v181
    %v218 = vunpack.c.l.b16 %v182
    %v219 = vunpack.c.l.b16 %v183
    %v220 = vunpack.c.l.b16 %v184
    %v221 = vunpack.c.l.b16 %v185
    %v222 = vunpack.c.l.b16 %v186
    %v223 = vunpack.c.l.b16 %v187
    %v224 = vunpack.c.l.b16 %v188
    %v225 = vunpack.c.l.b16 %v189
    %v226 = vunpack.c.l.b16 %v190
    %v227 = vunpack.c.l.b16 %v191
    %v228 = vunpack.c.l.b16 %v192
    %v229 = vpack.c.b16 %v214, %v213
    %v230 = vpack.c.b16 %v216, %v215
    %v231 = vpack.c.b16 %v218, %v217
    %v232 = vpack.c.b16 %v220, %v219
    %v233 = vpack.c.b16 %v222, %v221
    %v234 = vpack.c.b16 %v224, %v223
    %v235 = vpack.c.b16 %v226, %v225
    %v236 = vpack.c.b16 %v228, %v227
    %245 = vmatpush.bf16.msra.mxu0 %v236
    %246 = vmatpush.bf16.msra.mxu0 %v235
    %247 = vmatpush.bf16.msra.mxu0 %v234
    %248 = vmatpush.bf16.msra.mxu0 %v233
    %249 = vmatpush.bf16.msra.mxu0 %v232
    %250 = vmatpush.bf16.msra.mxu0 %v231
    %251 = vmatpush.bf16.msra.mxu0 %v230
    %252 = vmatpush.bf16.msra.mxu0 %v229
    %253 = vmatmul.bf16.gmra.mxu0 %v176
    %v254 = vpop.f32.mrf.mxu0
    %v255 = vadd.f32 %v195, %v254
    %v256 = vpop.f32.mrf.mxu0
    %v257 = vadd.f32 %v195, %v256
    %258 = vdwg.mxu0
    %259 = vst [vmem:[#allocation8] sm:$0xff] %v255
    %260 = vst [vmem:[#allocation8 + $0x8] sm:$0xff] %v257
    // Predicated region
    $region34: #{tpu_custom_call.1} parent=1 // pred_check
      _
    $region35: #{tpu_custom_call.1} parent=1 // pred_check_branch
      %262 = sbr.rel (0) target = $region37
    $region36: #{tpu_custom_call.1} parent=1 // pred_region
      %264 = vsyncadd [#allocation4], 0
      %s265 = sshll.u32 [#allocation8], 4
      %s266 = int_to_ptr.vmem [resolvable:$true] %s265
      %s267 = sshll.u32 %s5, 4
      %s268 = int_to_ptr.hbm [resolvable:$true] %s267
      %273 = dma.vmem_to_hbm [thread:$0]  %s266, 256, %s268, [#allocation4], 128, 128, 8
    $region37: #{tpu_custom_call.1} parent=1 // pred_fallthru
      _
    // Predicated region
    $region38: #{tpu_custom_call.1} parent=1 // pred_check
      _
    $region39: #{tpu_custom_call.1} parent=1 // pred_check_branch
      %275 = sbr.rel (0) target = $region41
    $region40: #{tpu_custom_call.1} parent=1 // pred_region
      %277 = dma.done [#allocation4], 256
    $region41: #{tpu_custom_call.1} parent=1 // pred_fallthru
      _
    %278 = vsyncpa [#allocation3], 1
    %279 = vsyncpa [#allocation6], 1
    %280 = vsyncpa [#allocation4], 1

</llo_original>
